<compile_context>
chip_gen: v6e
topology: v6e:2x2x1
jax: 0.10.0
libtpu: 0.0.40
codegen_flags: <defaults>
</compile_context>

<pallas_src>
import math
import functools

import jax
import jax.numpy as jnp
from jax.experimental import pallas as pl
from jax.experimental.pallas import tpu as pltpu

_LANES = 128
_TARGET_STEP_BYTES = 4 * 1024 * 1024      # streamed bytes per grid step
_MAX_VMEM_LIMIT = 48 * 1024 * 1024        # safe on v7x (64 MiB physical)


def _round_up(x, m):
    return ((x + m - 1) // m) * m


def _choose_row_tile(rows, bytes_per_row, row_align):
    """Rows per grid step: ~_TARGET_STEP_BYTES streamed per step, multiple of
    row_align, and an even number of (near-equal) steps so the two
    TensorCores of a v7x chip get balanced shards."""
    target = max(row_align, _TARGET_STEP_BYTES // max(bytes_per_row, 1))
    if rows <= target:
        return rows                            # single full block
    steps = pl.cdiv(rows, target)
    if steps > 1 and steps % 2:
        steps += 1                             # balance across 2 TCs (v7x)
    return min(rows, _round_up(pl.cdiv(rows, steps), row_align))


def _vmem_limit_bytes(tm, cin, cout, in_isz, out_isz, weight_bytes):
    """Derive the VMEM budget from the actual footprint instead of a fixed cap:
    2x (double-buffer) for the streamed input/output tiles + resident weights,
    plus headroom for compiler scratch."""
    stream = 2 * tm * (cin * in_isz + cout * out_isz)
    total = stream + weight_bytes + (64 << 10) + (4 << 20)
    return int(min(_MAX_VMEM_LIMIT, max(total, 8 << 20)))


# ---------------------------------------------------------------------------
# Kernels
# ---------------------------------------------------------------------------
def _td_matmul_kernel(d_ref, wt_ref, b_ref, o_ref):
    # MXU matmul with f32 accumulate; bias/relu on VPU; exp on EUP.
    acc = jnp.dot(d_ref[...], wt_ref[...], preferred_element_type=jnp.float32)
    gamma = jnp.maximum(acc + b_ref[...], 0.0)
    o_ref[...] = jnp.exp(-gamma).astype(o_ref.dtype)


def _td_diag_kernel(d_ref, w_ref, b_ref, o_ref):
    # diag(W) fast path: pure elementwise (VPU + EUP), no MXU pass.
    x = d_ref[...].astype(jnp.float32) * w_ref[...] + b_ref[...]
    o_ref[...] = jnp.exp(-jnp.maximum(x, 0.0)).astype(o_ref.dtype)


# ---------------------------------------------------------------------------
# Low-level pallas_call wrappers
# ---------------------------------------------------------------------------
def _dense_call(x2, wt, b_row, out_dtype):
    """exp(-relu(x2 @ wt + b_row)).  x2:(rows,cin), wt:(cin,cout), b:(1,cout)."""
    rows, cin = x2.shape
    cout = wt.shape[1]
    in_isz = x2.dtype.itemsize
    out_isz = jnp.dtype(out_dtype).itemsize
    row_align = 8 if in_isz >= 4 else 16
    tm = _choose_row_tile(rows, cin * in_isz + cout * out_isz, row_align)
    weight_bytes = wt.size * wt.dtype.itemsize + b_row.size * 4

    cost = pl.CostEstimate(
        flops=2 * rows * cin * cout,
        transcendentals=rows * cout,
        bytes_accessed=rows * cin * in_isz + rows * cout * out_isz + weight_bytes,
    )
    return pl.pallas_call(
        _td_matmul_kernel,
        out_shape=jax.ShapeDtypeStruct((rows, cout), out_dtype),
        grid_spec=pltpu.PrefetchScalarGridSpec(
            num_scalar_prefetch=0,
            grid=(pl.cdiv(rows, tm),),
            in_specs=[
                pl.BlockSpec((tm, cin), lambda i: (i, 0)),     # streamed rows
                pl.BlockSpec((cin, cout), lambda i: (0, 0)),   # resident W^T
                pl.BlockSpec((1, cout), lambda i: (0, 0)),     # resident bias
            ],
            out_specs=pl.BlockSpec((tm, cout), lambda i: (i, 0)),
        ),
        compiler_params=pltpu.CompilerParams(
            dimension_semantics=("parallel",),
            vmem_limit_bytes=_vmem_limit_bytes(
                tm, cin, cout, in_isz, out_isz, weight_bytes),
        ),
        cost_estimate=cost,
    )(x2, wt, b_row)


def _diag_call(x2, w_row, b_row, out_dtype):
    """exp(-relu(x2 * w_row + b_row)).  x2:(rows,cols), w/b:(1,cols) f32."""
    rows, cols = x2.shape
    in_isz = x2.dtype.itemsize
    out_isz = jnp.dtype(out_dtype).itemsize
    row_align = 8 if in_isz >= 4 else 16
    tm = _choose_row_tile(rows, cols * (in_isz + out_isz), row_align)

    cost = pl.CostEstimate(
        flops=3 * rows * cols,
        transcendentals=rows * cols,
        bytes_accessed=rows * cols * (in_isz + out_isz) + 2 * cols * 4,
    )
    return pl.pallas_call(
        _td_diag_kernel,
        out_shape=jax.ShapeDtypeStruct((rows, cols), out_dtype),
        grid_spec=pltpu.PrefetchScalarGridSpec(
            num_scalar_prefetch=0,
            grid=(pl.cdiv(rows, tm),),
            in_specs=[
                pl.BlockSpec((tm, cols), lambda i: (i, 0)),   # streamed rows
                pl.BlockSpec((1, cols), lambda i: (0, 0)),    # resident diag(W)
                pl.BlockSpec((1, cols), lambda i: (0, 0)),    # resident bias
            ],
            out_specs=pl.BlockSpec((tm, cols), lambda i: (i, 0)),
        ),
        compiler_params=pltpu.CompilerParams(
            dimension_semantics=("parallel",),
            vmem_limit_bytes=_vmem_limit_bytes(
                tm, cols, cols, in_isz, out_isz, 2 * cols * 4),
        ),
        cost_estimate=cost,
    )(x2, w_row, b_row)


# ---------------------------------------------------------------------------
# Path selection (lane-dense repack + tail split)
# ---------------------------------------------------------------------------
def _dense_forward(d2, W, b, out_dtype):
    """gamma = exp(-relu(d2 @ W.T + b)).  d2:(M, d_in), W:(d_out, d_in)."""
    M, d_in = d2.shape
    d_out = W.shape[0]
    wt = W.T.astype(d2.dtype)                         # (d_in, d_out), tiny
    b_row = b.astype(jnp.float32).reshape(1, d_out)

    # Lane-dense block-diagonal repack: (M, D) -> (M/G, 128) with
    # W_blk = kron(eye(G), W.T).  Full 128-lane stores and a 128x128 MXU tile
    # instead of masked 32-lane stores.  Only a sub-G tail (if any) uses the
    # narrow kernel; that tail costs one small slice + concat.
    if d_in == d_out and d_in < _LANES and _LANES % d_in == 0:
        G = _LANES // d_in
        head = (M // G) * G
        pieces = []
        if head:
            w_blk = jnp.kron(jnp.eye(G, dtype=wt.dtype), wt)   # (128, 128)
            b_blk = jnp.tile(b_row, (1, G))                    # (1, 128)
            x_head = d2[:head].reshape(head // G, _LANES)      # metadata-only
            out_head = _dense_call(x_head, w_blk, b_blk, out_dtype)
            pieces.append(out_head.reshape(head, d_out))
        if head < M:
            pieces.append(_dense_call(d2[head:], wt, b_row, out_dtype))
        return pieces[0] if len(pieces) == 1 else jnp.concatenate(pieces, axis=0)

    return _dense_call(d2, wt, b_row, out_dtype)


def _diag_forward(d2, w_diag, b, out_dtype):
    """gamma = exp(-relu(d2 * diag(W) + b)) — the W*eye matmul collapses."""
    M, d_in = d2.shape
    w_row = w_diag.astype(jnp.float32).reshape(1, d_in)
    b_row = b.astype(jnp.float32).reshape(1, d_in)

    if d_in < _LANES and _LANES % d_in == 0:
        rep = _LANES // d_in
        head = (M // rep) * rep
        pieces = []
        if head:
            x_head = d2[:head].reshape((head * d_in) // _LANES, _LANES)
            w_wide = jnp.tile(w_row, (1, rep))
            b_wide = jnp.tile(b_row, (1, rep))
            out_head = _diag_call(x_head, w_wide, b_wide, out_dtype)
            pieces.append(out_head.reshape(head, d_in))
        if head < M:
            pieces.append(_diag_call(d2[head:], w_row, b_row, out_dtype))
        return pieces[0] if len(pieces) == 1 else jnp.concatenate(pieces, axis=0)

    return _diag_call(d2, w_row, b_row, out_dtype)


@functools.partial(jax.jit, static_argnames=("diag", "out_dtype"))
def temporal_decay_forward(d, W, b, diag=False, out_dtype=None):
    """gamma = exp(-relu(F.linear(d, W [* eye], b))) via Pallas TPU kernels.

    d: (..., d_in), W: (d_out, d_in), b: (d_out,).
    `out_dtype=jnp.bfloat16` only changes the OUTPUT dtype (write-bandwidth
    saving); the input is streamed in its stored dtype — no extra HBM pass.
    """
    d_out, d_in = W.shape
    lead_shape = d.shape[:-1]
    M = int(math.prod(lead_shape)) if lead_shape else 1
    d2 = d.reshape(M, d_in)
    out_dt = jnp.dtype(out_dtype) if out_dtype is not None else jnp.dtype(d2.dtype)

    if diag:
        assert d_in == d_out
        out = _diag_forward(d2, jnp.diagonal(W), b, out_dt)
    else:
        out = _dense_forward(d2, W, b, out_dt)

    return out.reshape(*lead_shape, d_out)


def init_temporal_decay_params(key, d_in, d_out):
    """Deterministic re-implementation of reset_parameters (uniform(-stdv, stdv))."""
    stdv = 1.0 / math.sqrt(d_out)
    kW, kb = jax.random.split(key)
    W = jax.random.uniform(kW, (d_out, d_in), jnp.float32, -stdv, stdv)
    b = jax.random.uniform(kb, (d_out,), jnp.float32, -stdv, stdv)
    return W, b


# TODO(synk): compute_delta (a sequential host-side recurrence over timesteps,
# not part of forward) is left to plain JAX / host code; no Pallas equivalent.

if __name__ == "__main__":
    key = jax.random.PRNGKey(0)
    k_d, k_p, k_d2, k_p2 = jax.random.split(key, 4)

    B, T, D = 2, 8, 32          # batch, seq, feature (d_in == d_out == D)
    d = jax.random.uniform(k_d, (B, T, D), jnp.float32, 0.0, 5.0)   # delta-like
    W, b = init_temporal_decay_params(k_p, D, D)
    eye = jnp.eye(D, dtype=jnp.float32)

    ref_dense = jnp.exp(-jnp.maximum(d @ W.T + b, 0.0))
    ref_diag = jnp.exp(-jnp.maximum(d @ (W * eye).T + b, 0.0))

    gamma = jax.block_until_ready(temporal_decay_forward(d, W, b, diag=False))
    assert gamma.shape == (B, T, D)
    assert jnp.allclose(gamma, ref_dense, atol=2e-5, rtol=2e-5)

    gamma_diag = jax.block_until_ready(temporal_decay_forward(d, W, b, diag=True))
    assert gamma_diag.shape == (B, T, D)
    assert jnp.allclose(gamma_diag, ref_diag, atol=2e-5, rtol=2e-5)

    # Rectangular dense (d_out != d_in): exercises the narrow matmul path.
    D_OUT2 = 48
    W2, b2 = init_temporal_decay_params(k_p2, D, D_OUT2)
    ref_rect = jnp.exp(-jnp.maximum(d @ W2.T + b2, 0.0))
    g_rect = jax.block_until_ready(temporal_decay_forward(d, W2, b2, diag=False))
    assert g_rect.shape == (B, T, D_OUT2)
    assert jnp.allclose(g_rect, ref_rect, atol=2e-5, rtol=2e-5)

    # Larger M with M % (128//D) != 0: exercises byte-targeted row tiling and
    # the lane-dense head / narrow tail split on both paths.
    B2, T2 = 2, 601             # M = 1202 -> head 1200 lane-dense, tail 2
    d_big = jax.random.uniform(k_d2, (B2, T2, D), jnp.float32, 0.0, 5.0)
    ref_big = jnp.exp(-jnp.maximum(d_big @ W.T + b, 0.0))
    ref_big_diag = jnp.exp(-jnp.maximum(d_big @ (W * eye).T + b, 0.0))
    g_big = jax.block_until_ready(temporal_decay_forward(d_big, W, b, diag=False))
    g_big_diag = jax.block_until_ready(temporal_decay_forward(d_big, W, b, diag=True))
    assert jnp.allclose(g_big, ref_big, atol=2e-5, rtol=2e-5)
    assert jnp.allclose(g_big_diag, ref_big_diag, atol=2e-5, rtol=2e-5)

    # bf16 OUTPUT (halves write bytes; input still streamed as stored f32).
    g_bf_out = jax.block_until_ready(
        temporal_decay_forward(d, W, b, diag=False, out_dtype=jnp.bfloat16))
    assert g_bf_out.dtype == jnp.bfloat16
    assert jnp.allclose(g_bf_out.astype(jnp.float32), ref_dense, atol=1e-2, rtol=1e-2)

    # bf16 INPUT already stored upstream (no wrapper-side astype pass).
    d_bf = d.astype(jnp.bfloat16)
    W_r = W.astype(jnp.bfloat16).astype(jnp.float32)
    ref_bf = jnp.exp(-jnp.maximum(d_bf.astype(jnp.float32) @ W_r.T + b, 0.0))
    g_bf = jax.block_until_ready(temporal_decay_forward(d_bf, W, b, diag=False))
    assert g_bf.dtype == jnp.bfloat16
    assert jnp.allclose(g_bf.astype(jnp.float32), ref_bf, atol=2e-2, rtol=2e-2)

    print("KERNEL_OK")
</pallas_src>

<mosaic_0001>
module attributes {stable_mosaic.version = 11 : i64} {
  func.func @_td_matmul_kernel(%arg0: i32, %arg1: memref<4x128xf32, #tpu.memory_space<vmem>>, %arg2: memref<128x128xf32, #tpu.memory_space<vmem>>, %arg3: memref<1x128xf32, #tpu.memory_space<vmem>>, %arg4: memref<4x128xf32, #tpu.memory_space<vmem>>) attributes {dimension_semantics = [#tpu.dimension_semantics<parallel>], iteration_bounds = array<i64: 1>, scalar_prefetch = 0 : i64, scratch_operands = 0 : i64, tpu.core_type = #tpu.core_type<tc>, window_params = [{transform_indices = @transform_0, window_bounds = array<i64: 4, 128>}, {pipeline_mode = #tpu.pipeline_mode<synchronous>, transform_indices = @transform_1, window_bounds = array<i64: 128, 128>}, {pipeline_mode = #tpu.pipeline_mode<synchronous>, transform_indices = @transform_2, window_bounds = array<i64: 1, 128>}, {transform_indices = @transform_3, window_bounds = array<i64: 4, 128>}]} {
    %c0 = arith.constant 0 : index
    %c0_0 = arith.constant 0 : index
    %0 = vector.load %arg1[%c0, %c0_0] : memref<4x128xf32, #tpu.memory_space<vmem>>, vector<4x128xf32>
    %c0_1 = arith.constant 0 : index
    %c0_2 = arith.constant 0 : index
    %1 = vector.load %arg2[%c0_1, %c0_2] : memref<128x128xf32, #tpu.memory_space<vmem>>, vector<128x128xf32>
    %cst = arith.constant dense<0.000000e+00> : vector<4x128xf32>
    %2 = tpu.matmul %0, %1, %cst {dimension_numbers = #tpu.dot_dimension_numbers<[1], [0], [0], [1], [0, 0, 1, 1], [], []>} : vector<4x128xf32>, vector<128x128xf32>, vector<4x128xf32> -> vector<4x128xf32>
    %c0_3 = arith.constant 0 : index
    %c0_4 = arith.constant 0 : index
    %3 = vector.load %arg3[%c0_3, %c0_4] : memref<1x128xf32, #tpu.memory_space<vmem>>, vector<1x128xf32>
    %4 = vector.broadcast %3 : vector<1x128xf32> to vector<4x128xf32>
    %5 = arith.addf %2, %4 : vector<4x128xf32>
    %cst_5 = arith.constant 0.000000e+00 : f32
    %6 = vector.broadcast %cst_5 : f32 to vector<4x128xf32>
    %7 = arith.maximumf %5, %6 : vector<4x128xf32>
    %cst_6 = arith.constant 0.000000e+00 : f32
    %8 = vector.broadcast %cst_6 : f32 to vector<4x128xf32>
    %9 = arith.subf %8, %7 : vector<4x128xf32>
    %10 = math.exp %9 : vector<4x128xf32>
    %c0_7 = arith.constant 0 : index
    %c0_8 = arith.constant 0 : index
    %11 = vector.load %arg4[%c0_7, %c0_8] : memref<4x128xf32, #tpu.memory_space<vmem>>, vector<4x128xf32>
    tpu.vector_store %arg4[%c0_7, %c0_8], %10 {strides = array<i32>} : memref<4x128xf32, #tpu.memory_space<vmem>>, vector<4x128xf32>,
    return
  }
  func.func @transform_0(%arg0: i32) -> (i32, i32) {
    %c0_i32 = arith.constant 0 : i32
    %c0_i32_0 = arith.constant 0 : i32
    return %arg0, %c0_i32 : i32, i32
  }
  func.func @transform_1(%arg0: i32) -> (i32, i32) {
    %c0_i32 = arith.constant 0 : i32
    %c0_i32_0 = arith.constant 0 : i32
    %c0_i32_1 = arith.constant 0 : i32
    return %c0_i32, %c0_i32_0 : i32, i32
  }
  func.func @transform_2(%arg0: i32) -> (i32, i32) {
    %c0_i32 = arith.constant 0 : i32
    %c0_i32_0 = arith.constant 0 : i32
    %c0_i32_1 = arith.constant 0 : i32
    return %c0_i32, %c0_i32_0 : i32, i32
  }
  func.func @transform_3(%arg0: i32) -> (i32, i32) {
    %c0_i32 = arith.constant 0 : i32
    %c0_i32_0 = arith.constant 0 : i32
    return %arg0, %c0_i32 : i32, i32
  }
}

</mosaic_0001>

<llo_original>
// kernel: temporal_decay_forward.1
$region0: #{temporal_decay_forward.1}
  #allocation0 [shape = 'u32[]', space=smem, size = 0x4, offset = 0x4, fixed_abs, tag = 'smem constant byte address 0x4 - core index']
  #allocation1 [shape = 'u32[144,128]{1,0:T(1,128)}', space=vmem, size = 0x12000, scoped, tag = 'internal scratch']
  %s0 = inlined_call_operand.vmem [shape: f32[4,128], index: 0, kind: input, shape index: {}]
  %s1 = inlined_call_operand.vmem [shape: f32[128,128], index: 1, kind: input, shape index: {}]
  %s2 = inlined_call_operand.vmem [shape: f32[1,128], index: 2, kind: input, shape index: {}]
  %s3 = inlined_call_operand.vmem [shape: f32[4,128], index: 3, kind: output, shape index: {}]
  %s4 = sld [smem:[#allocation0]]
  $region22: #{temporal_decay_forward.1} parent=0
    _
  %s6 = ssub.s32 1, %s4
  %s7 = scalar_select 0, %s6, %s4
  // Predicated region
  $region2: #{temporal_decay_forward.1} parent=0 // pred_check
    _
  $region3: #{temporal_decay_forward.1} parent=0 // pred_check_branch
    %9 = sbr.rel (0) target = $region5
  $region4: #{temporal_decay_forward.1} parent=0 // pred_region
    _
  $region5: #{temporal_decay_forward.1} parent=0 // pred_fallthru
    _
  // Predicated region
  $region6: #{temporal_decay_forward.1} parent=0 // pred_check
    _
  $region7: #{temporal_decay_forward.1} parent=0 // pred_check_branch
    %11 = sbr.rel (0) target = $region9
  $region8: #{temporal_decay_forward.1} parent=0 // pred_region
    _
  $region9: #{temporal_decay_forward.1} parent=0 // pred_fallthru
    _
  // Predicated region
  $region10: #{temporal_decay_forward.1} parent=0 // pred_check
    _
  $region11: #{temporal_decay_forward.1} parent=0 // pred_check_branch
    %13 = sbr.rel (0) target = $region13
  $region12: #{temporal_decay_forward.1} parent=0 // pred_region
    _
  $region13: #{temporal_decay_forward.1} parent=0 // pred_fallthru
    _
  %v14 = vld [vmem:[%s0] sm:$0xf]
  %v15 = vld [vmem:[%s1] sm:$0xff]
  %v16 = vld [vmem:[%s1 + $0x8] sm:$0xff]
  %v17 = vld [vmem:[%s1 + $0x10] sm:$0xff]
  %v18 = vld [vmem:[%s1 + $0x18] sm:$0xff]
  %v19 = vld [vmem:[%s1 + $0x20] sm:$0xff]
  %v20 = vld [vmem:[%s1 + $0x28] sm:$0xff]
  %v21 = vld [vmem:[%s1 + $0x30] sm:$0xff]
  %v22 = vld [vmem:[%s1 + $0x38] sm:$0xff]
  %v23 = vld [vmem:[%s1 + $0x40] sm:$0xff]
  %v24 = vld [vmem:[%s1 + $0x48] sm:$0xff]
  %v25 = vld [vmem:[%s1 + $0x50] sm:$0xff]
  %v26 = vld [vmem:[%s1 + $0x58] sm:$0xff]
  %v27 = vld [vmem:[%s1 + $0x60] sm:$0xff]
  %v28 = vld [vmem:[%s1 + $0x68] sm:$0xff]
  %v29 = vld [vmem:[%s1 + $0x70] sm:$0xff]
  %v30 = vld [vmem:[%s1 + $0x78] sm:$0xff]
  %v31 = vld [vmem:[%s2] sm:$0x1]
  %v33 = vlaneseq
  %v34 = vshrl.u32 %v33, 7
  %v35 = vsub.s32 0, %v34
  %v36 = vrot.slane %v31, %v35
  %38 = vmatprep.subr.mxu0 0.0
  %39 = vmatpush1.msra.mxu0 %v30
  %40 = vmatprep.subr.mxu0 0.0
  %41 = vmatpush1.msra.mxu0 %v29
  %42 = vmatprep.subr.mxu0 0.0
  %43 = vmatpush1.msra.mxu0 %v28
  %44 = vmatprep.subr.mxu0 0.0
  %45 = vmatpush1.msra.mxu0 %v27
  %46 = vmatprep.subr.mxu0 0.0
  %47 = vmatpush1.msra.mxu0 %v26
  %48 = vmatprep.subr.mxu0 0.0
  %49 = vmatpush1.msra.mxu0 %v25
  %50 = vmatprep.subr.mxu0 0.0
  %51 = vmatpush1.msra.mxu0 %v24
  %52 = vmatprep.subr.mxu0 0.0
  %53 = vmatpush1.msra.mxu0 %v23
  %54 = vmatprep.subr.mxu0 0.0
  %55 = vmatpush1.msra.mxu0 %v22
  %56 = vmatprep.subr.mxu0 0.0
  %57 = vmatpush1.msra.mxu0 %v21
  %58 = vmatprep.subr.mxu0 0.0
  %59 = vmatpush1.msra.mxu0 %v20
  %60 = vmatprep.subr.mxu0 0.0
  %61 = vmatpush1.msra.mxu0 %v19
  %62 = vmatprep.subr.mxu0 0.0
  %63 = vmatpush1.msra.mxu0 %v18
  %64 = vmatprep.subr.mxu0 0.0
  %65 = vmatpush1.msra.mxu0 %v17
  %66 = vmatprep.subr.mxu0 0.0
  %67 = vmatpush1.msra.mxu0 %v16
  %68 = vmatprep.subr.mxu0 0.0
  %69 = vmatpush1.msra.mxu0 %v15
  %70 = vmatprep.subr.mxu0 0.0
  %71 = vmatpush2.msra.mxu0 0.0
  %72 = vmatprep.subr.mxu0 0.0
  %73 = vmatpush2.msra.mxu0 0.0
  %74 = vmatprep.subr.mxu0 0.0
  %75 = vmatpush2.msra.mxu0 0.0
  %76 = vmatprep.subr.mxu0 0.0
  %77 = vmatpush2.msra.mxu0 0.0
  %78 = vmatprep.subr.mxu0 0.0
  %79 = vmatpush2.msra.mxu0 0.0
  %80 = vmatprep.subr.mxu0 0.0
  %81 = vmatpush2.msra.mxu0 0.0
  %82 = vmatprep.subr.mxu0 0.0
  %83 = vmatpush2.msra.mxu0 0.0
  %84 = vmatprep.subr.mxu0 0.0
  %85 = vmatpush2.msra.mxu0 0.0
  %86 = vmatprep.subr.mxu0 0.0
  %87 = vmatpush2.msra.mxu0 0.0
  %88 = vmatprep.subr.mxu0 0.0
  %89 = vmatpush2.msra.mxu0 0.0
  %90 = vmatprep.subr.mxu0 0.0
  %91 = vmatpush2.msra.mxu0 0.0
  %92 = vmatprep.subr.mxu0 0.0
  %93 = vmatpush2.msra.mxu0 0.0
  %94 = vmatprep.subr.mxu0 0.0
  %95 = vmatpush2.msra.mxu0 0.0
  %96 = vmatprep.subr.mxu0 0.0
  %97 = vmatpush2.msra.mxu0 0.0
  %98 = vmatprep.subr.mxu0 0.0
  %99 = vmatpush2.msra.mxu0 0.0
  %100 = vmatprep.subr.mxu0 0.0
  %101 = vmatpush2.msra.mxu0 0.0
  %102 = vmatprep.mubr.f32.mxu0 0.0
  %103 = vmatmul.mubr.f32.gmra.mxu0 %v14
  %v104 = vpop.f32.mrf.mxu0
  %v105 = vadd.f32 %v36, %v104
  %v106 = vpop.f32.mrf.mxu0
  %107 = vdwg.mxu0
  %v108 = vmax.f32 %v105, 0.0
  %v109 = vsub.f32 0.0, %v108
  %v110 = vmul.f32 %v109, 1.442695
  %v111 = vpow.pop %v110
  %112 = vst [vmem:[%s3] sm:$0xf] %v111
  // Predicated region
  $region14: #{temporal_decay_forward.1} parent=0 // pred_check
    _
  $region15: #{temporal_decay_forward.1} parent=0 // pred_check_branch
    %114 = sbr.rel (0) target = $region17
  $region16: #{temporal_decay_forward.1} parent=0 // pred_region
    _
  $region17: #{temporal_decay_forward.1} parent=0 // pred_fallthru
    _
  // Predicated region
  $region18: #{temporal_decay_forward.1} parent=0 // pred_check
    _
  $region19: #{temporal_decay_forward.1} parent=0 // pred_check_branch
    %116 = sbr.rel (0) target = $region21
  $region20: #{temporal_decay_forward.1} parent=0 // pred_region
    _
  $region21: #{temporal_decay_forward.1} parent=0 // pred_fallthru
    _

</llo_original>
